<compile_context>
chip_gen: v7x
topology: tpu7x:2x2x1
jax: 0.10.0
libtpu: 0.0.40
codegen_flags: <defaults>
</compile_context>

<pallas_src>
import jax
import jax.numpy as jnp
from jax.experimental import pallas as pl
from jax.experimental.pallas import tpu as pltpu

LANES = 128

# ---- chip-aware block sizing (queried once at import time) -----------------
try:
    _VMEM_CAP = int(pltpu.get_tpu_info().vmem_capacity_bytes)
except Exception:  # conservative fallback if the query is unavailable
    _VMEM_CAP = 64 << 20

if _VMEM_CAP >= (128 << 20):      # v5e / v6e: 128 MiB physical VMEM
    _BLOCK_BYTES = 8 << 20        # 8 MiB tiles -> 32 MiB double-buffered in+out
    _VMEM_LIMIT = 48 << 20
else:                             # v7x: 64 MiB physical VMEM per TensorCore
    _BLOCK_BYTES = 4 << 20        # 4 MiB tiles -> 16 MiB double-buffered in+out
    _VMEM_LIMIT = 40 << 20


def _round_up(a, m):
    return -(-a // m) * m


# ---- kernels ----------------------------------------------------------------
def _copy_kernel(x_ref, o_ref):
    # Identity copy of one (block_rows, 128) VMEM tile.
    o_ref[...] = x_ref[...]


def _dma_copy_kernel(x_hbm, o_hbm, sem):
    # Direct HBM->HBM copy; no VMEM staging, any length, generation-agnostic.
    cp = pltpu.make_async_copy(x_hbm, o_hbm, sem)
    cp.start()
    cp.wait()


# ---- pallas_call wrappers ----------------------------------------------------
def _tiled_copy(flat, donate):
    """Pipelined lane-dense copy; requires numel % 128 == 0."""
    numel = flat.size
    itemsize = jnp.dtype(flat.dtype).itemsize
    packed = max(8, 32 // itemsize)      # rows per vreg: 8 f32 / 16 bf16 / 32 int8
    rows = numel // LANES
    slab = flat.reshape(rows, LANES)     # metadata-only under jit

    block_rows = _round_up(max(packed, _BLOCK_BYTES // (LANES * itemsize)), packed)
    if rows > packed:
        # Keep >= 2 blocks so mid-size arrays split across v7x's 2 TensorCores.
        block_rows = min(block_rows, _round_up((rows + 1) // 2, packed))
    if block_rows >= rows:
        # Small array: a single block that exactly (or minimally) covers it.
        block_rows = _round_up(rows, 8)

    grid = (pl.cdiv(rows, block_rows),)  # partial last block is masked by Pallas

    return pl.pallas_call(
        _copy_kernel,
        out_shape=jax.ShapeDtypeStruct((rows, LANES), flat.dtype),
        grid_spec=pltpu.PrefetchScalarGridSpec(
            num_scalar_prefetch=0,
            grid=grid,
            in_specs=[pl.BlockSpec((block_rows, LANES), lambda i: (i, 0))],
            out_specs=pl.BlockSpec((block_rows, LANES), lambda i: (i, 0)),
        ),
        compiler_params=pltpu.CompilerParams(
            dimension_semantics=("parallel",),
            vmem_limit_bytes=_VMEM_LIMIT,
        ),
        cost_estimate=pl.CostEstimate(
            flops=0, transcendentals=0, bytes_accessed=2 * numel * itemsize),
        # donate=True is an identity self-copy (no observable effect); kept only
        # for callers that must reuse the input buffer.
        input_output_aliases=({0: 0} if donate else {}),
    )(slab)


def _dma_copy(flat):
    """Direct HBM->HBM DMA copy of the whole flat stream (any numel)."""
    numel = flat.size
    itemsize = jnp.dtype(flat.dtype).itemsize
    return pl.pallas_call(
        _dma_copy_kernel,
        out_shape=jax.ShapeDtypeStruct((numel,), flat.dtype),
        in_specs=[pl.BlockSpec(memory_space=pl.ANY)],
        out_specs=pl.BlockSpec(memory_space=pl.ANY),
        scratch_shapes=[pltpu.SemaphoreType.DMA],
        cost_estimate=pl.CostEstimate(
            flops=0, transcendentals=0, bytes_accessed=2 * numel * itemsize),
    )(flat)


# ---- torch.view size resolution ---------------------------------------------
def _resolve_size(size, numel):
    """Resolve a torch.view-style size tuple (supports a single -1)."""
    if isinstance(size, int):
        size = (size,)
    size = tuple(int(s) for s in size)
    if size.count(-1) > 1:
        raise ValueError("only one dimension can be inferred (-1)")
    if -1 in size:
        known = 1
        for s in size:
            if s != -1:
                known *= s
        if known == 0:
            if numel != 0:
                raise ValueError(f"cannot view {numel} elements as {size}")
            inferred = 0
        else:
            if numel % known != 0:
                raise ValueError(f"cannot view {numel} elements as {size}")
            inferred = numel // known
        size = tuple(inferred if s == -1 else s for s in size)
    prod = 1
    for s in size:
        prod *= s
    if prod != numel:
        raise ValueError(f"size {size} incompatible with {numel} elements")
    return size


# ---- public entry point -------------------------------------------------------
def _view_impl(x, out_size, donate, use_pallas, use_dma):
    numel = x.size
    if not use_pallas or numel == 0:
        # torch.view is metadata-only; this is the honest equivalent.
        return x.reshape(out_size)
    flat = x.reshape(-1)                       # metadata-only under jit
    if use_dma or (numel % LANES != 0):
        return _dma_copy(flat).reshape(out_size)
    return _tiled_copy(flat, donate).reshape(out_size)


_view_jit = jax.jit(_view_impl, static_argnums=(1, 2, 3, 4))


def view_pallas(x, size, *, donate=False, use_pallas=True, use_dma=False):
    """Equivalent of torch.Tensor.view(size), materialized by a Pallas copy.

    donate=True aliases the input buffer to the output (caller must not reuse
    `x`).  use_pallas=False does the metadata-only reshape.  use_dma=True
    forces the direct HBM->HBM DMA path.
    """
    out_size = _resolve_size(size, x.size)
    return _view_jit(x, out_size, bool(donate), bool(use_pallas), bool(use_dma))


class View:
    """JAX/Pallas counterpart of the PyTorch View module."""

    def __init__(self, size):
        self.size = size

    def __call__(self, tensor):
        return view_pallas(tensor, self.size)


if __name__ == "__main__":
    key = jax.random.PRNGKey(0)
    k0, k1, k2 = jax.random.split(key, 3)

    # NCHW input, same convention the PyTorch module would receive.
    x = jax.random.normal(k0, (2, 4, 16, 16), dtype=jnp.float32)

    # View to (batch, -1): typical flatten-before-linear usage (aligned path).
    mod = View((2, -1))
    y = jax.block_until_ready(mod(x))
    ref = x.reshape(2, -1)
    assert y.shape == (2, 4 * 16 * 16)
    assert y.dtype == x.dtype
    assert bool(jnp.array_equal(y, ref))

    # Ragged (numel % 128 != 0): direct HBM->HBM DMA path, no pad / no slice.
    x2 = jax.random.normal(k1, (3, 5, 7), dtype=jnp.float32)
    y2 = jax.block_until_ready(view_pallas(x2, (-1,)))
    assert y2.shape == (3 * 5 * 7,)
    assert bool(jnp.array_equal(y2, x2.reshape(-1)))

    # Sub-32-bit dtype with a small row count (packed-sublane edge case).
    x3 = jax.random.normal(k2, (4, 8, 32), dtype=jnp.bfloat16)
    y3 = jax.block_until_ready(view_pallas(x3, (4, -1)))
    assert y3.shape == (4, 256) and y3.dtype == jnp.bfloat16
    assert bool(jnp.array_equal(y3, x3.reshape(4, -1)))

    # Explicit HBM->HBM DMA variant on an aligned input.
    y4 = jax.block_until_ready(view_pallas(x, (8, 256), use_dma=True))
    assert bool(jnp.array_equal(y4, x.reshape(8, 256)))

    print("KERNEL_OK")
</pallas_src>

<mosaic_0001>
module attributes {stable_mosaic.version = 11 : i64} {
  func.func @_copy_kernel(%arg0: i32, %arg1: memref<8x128xf32, #tpu.memory_space<vmem>>, %arg2: memref<8x128xf32, #tpu.memory_space<vmem>>) attributes {dimension_semantics = [#tpu.dimension_semantics<parallel>], iteration_bounds = array<i64: 2>, scalar_prefetch = 0 : i64, scratch_operands = 0 : i64, tpu.core_type = #tpu.core_type<tc>, window_params = [{transform_indices = @transform_0, window_bounds = array<i64: 8, 128>}, {transform_indices = @transform_1, window_bounds = array<i64: 8, 128>}]} {
    %c0 = arith.constant 0 : index
    %c0_0 = arith.constant 0 : index
    %0 = vector.load %arg1[%c0, %c0_0] : memref<8x128xf32, #tpu.memory_space<vmem>>, vector<8x128xf32>
    %c0_1 = arith.constant 0 : index
    %c0_2 = arith.constant 0 : index
    %1 = vector.load %arg2[%c0_1, %c0_2] : memref<8x128xf32, #tpu.memory_space<vmem>>, vector<8x128xf32>
    tpu.vector_store %arg2[%c0_1, %c0_2], %0 {strides = array<i32>} : memref<8x128xf32, #tpu.memory_space<vmem>>, vector<8x128xf32>,
    return
  }
  func.func @transform_0(%arg0: i32) -> (i32, i32) {
    %c0_i32 = arith.constant 0 : i32
    %c0_i32_0 = arith.constant 0 : i32
    return %arg0, %c0_i32 : i32, i32
  }
  func.func @transform_1(%arg0: i32) -> (i32, i32) {
    %c0_i32 = arith.constant 0 : i32
    %c0_i32_0 = arith.constant 0 : i32
    return %arg0, %c0_i32 : i32, i32
  }
}

</mosaic_0001>

<llo_original>
// kernel: _view_impl.1
$region0: #{_view_impl.1}
  #allocation0 [shape = 'u32[]', space=smem, size = 0x4, offset = 0x4, fixed_abs, tag = 'smem constant byte address 0x4 - core index']
  #allocation1 [shape = 'u32[144,128]{1,0:T(1,128)}', space=vmem, size = 0x12000, scoped, tag = 'internal scratch']
  %s0 = inlined_call_operand.vmem [shape: f32[16,128], index: 0, kind: input, shape index: {}]
  %s1 = inlined_call_operand.vmem [shape: f32[16,128], index: 1, kind: output, shape index: {}]
  %s2 = sld [smem:[#allocation0]]
  $region37: #{_view_impl.1} parent=0
    _
  %s4 = ssub.s32 1, %s2
  %s5 = scalar_select 0, %s4, %s2
  loop: start=0, step=1, limit=4
  $region2: #{_view_impl.1} parent=0 // loop_pre_header
    _
  $region3: #{_view_impl.1} parent=0 // loop_header
    %s7 = sphi 0, %s11
    %p8 = scmp.ge.s32.totalorder %s7, 4
    %s17 = sphi 0, %s19
    %s20 = sphi 0, %s17
    %s21 = sphi 0, %s20
    %s37 = sphi 0, %s21
    %s43 = sphi 0, %s45
    %s46 = sphi 0, %s43
    %s47 = sphi 0, %s46
    %s63 = sphi 0, %s47
  $region4: #{_view_impl.1} parent=0 // loop_header_branch
    %10 = sbr.rel (%p8) target = $region8
  $region5: #{_view_impl.1} parent=0 // loop_body
    %s12 = ssub.s32 %s7, 1
    %s13 = ssub.s32 %s7, 2
    %s14 = sadd.s32 %s7, 1
    %s15 = ssub.s32 %s7, %s14
    %p16 = scmp.eq.s32.totalorder %s15, 0
    %s18 = sadd.s32 %s17, 1
    %s19 = scalar_select %p16, %s17, %s18
    %p22 = pneg %p16
    %p23 = scmp.eq.s32.totalorder %s7, 1
    %p24 = por %p22, %p23
    %p25 = scmp.ne.s32.totalorder %s17, %s20
    %p26 = scmp.eq.s32.totalorder %s7, 0
    %p27 = por %p25, %p26
    %p28 = scmp.ne.s32.totalorder %s17, %s20
    %p29 = scmp.eq.s32.totalorder %s12, 1
    %p30 = por %p28, %p29
    %p31 = scmp.ne.s32.totalorder %s20, %s21
    %p32 = scmp.eq.s32.totalorder %s12, 0
    %p33 = por %p31, %p32
    %p34 = scmp.ne.s32.totalorder %s20, %s21
    %p35 = scmp.eq.s32.totalorder %s13, 1
    %p36 = por %p34, %p35
    %p38 = scmp.ne.s32.totalorder %s21, %s37
    %p39 = scmp.eq.s32.totalorder %s13, 0
    %p40 = por %p38, %p39
    %s41 = ssub.s32 %s7, %s14
    %p42 = scmp.eq.s32.totalorder %s41, 0
    %s44 = sadd.s32 %s43, 1
    %s45 = scalar_select %p42, %s43, %s44
    %p48 = pneg %p42
    %p49 = scmp.eq.s32.totalorder %s7, 1
    %p50 = por %p48, %p49
    %p51 = scmp.ne.s32.totalorder %s43, %s46
    %p52 = scmp.eq.s32.totalorder %s7, 0
    %p53 = por %p51, %p52
    %p54 = scmp.ne.s32.totalorder %s43, %s46
    %p55 = scmp.eq.s32.totalorder %s12, 1
    %p56 = por %p54, %p55
    %p57 = scmp.ne.s32.totalorder %s46, %s47
    %p58 = scmp.eq.s32.totalorder %s12, 0
    %p59 = por %p57, %p58
    %p60 = scmp.ne.s32.totalorder %s46, %s47
    %p61 = scmp.eq.s32.totalorder %s13, 1
    %p62 = por %p60, %p61
    %p64 = scmp.ne.s32.totalorder %s47, %s63
    %p65 = scmp.eq.s32.totalorder %s13, 0
    %p66 = por %p64, %p65
    %p67 = scmp.le.s32.totalorder 1, %s7
    %p68 = scmp.lt.s32.totalorder %s7, 3
    %p69 = pnand %p67, %p68
    %p70 = pneg %p69
    // Predicated region
    $region9: #{_view_impl.1} parent=5 // pred_check
      _
    $region10: #{_view_impl.1} parent=5 // pred_check_branch
      %72 = sbr.rel (%p69) target = $region12
    $region11: #{_view_impl.1} parent=5 // pred_region
      %s73 = ssub.s32 %s7, 1
    $region12: #{_view_impl.1} parent=5 // pred_fallthru
      _
    %p74 = scmp.lt.s32.totalorder %s7, 2
    // Predicated region
    $region13: #{_view_impl.1} parent=5 // pred_check
      %p75 = pneg %p74
    $region14: #{_view_impl.1} parent=5 // pred_check_branch
      %77 = sbr.rel (%p75) target = $region16
    $region15: #{_view_impl.1} parent=5 // pred_region
      // Predicated region
      $region17: #{_view_impl.1} parent=15 // pred_check
        %p78 = pneg %p27
      $region18: #{_view_impl.1} parent=15 // pred_check_branch
        %80 = sbr.rel (%p78) target = $region20
      $region19: #{_view_impl.1} parent=15 // pred_region
        %p81 = scmp.lt.s32.totalorder %s7, 1
        %s82 = scalar_select %p81, %s7, 1
        %s83 = smul.addr %s82, 8
        %s84 = scalar_lea.vmem %s0, %s83
      $region20: #{_view_impl.1} parent=15 // pred_fallthru
        _
    $region16: #{_view_impl.1} parent=5 // pred_fallthru
      _
    %p85 = scmp.le.s32.totalorder 1, %s7
    %p86 = scmp.lt.s32.totalorder %s7, 3
    %p87 = pnand %p85, %p86
    %p88 = pneg %p87
    // Predicated region
    $region21: #{_view_impl.1} parent=5 // pred_check
      _
    $region22: #{_view_impl.1} parent=5 // pred_check_branch
      %90 = sbr.rel (%p87) target = $region24
    $region23: #{_view_impl.1} parent=5 // pred_region
      %s91 = ssub.s32 %s7, 1
      %p92 = scmp.lt.s32.totalorder %s12, 1
      %s93 = scalar_select %p92, %s12, 1
      %s94 = smul.addr %s93, 8
      %s95 = scalar_lea.vmem %s0, %s94
      %p96 = pneg %p33
      %p97 = pneg %p30
      %p98 = pneg %p59
      %p99 = pneg %p56
      %p100 = scmp.lt.s32.totalorder %s12, 1
      %s101 = scalar_select %p100, %s12, 1
      %s102 = smul.addr %s101, 8
      %s103 = scalar_lea.vmem %s1, %s102
      %p104 = scmp.lt.s32.totalorder %s12, 1
      %s105 = scalar_select %p104, %s12, 1
      %s106 = smul.addr %s105, 8
      %s107 = scalar_lea.vmem %s0, %s106
      %p108 = scmp.lt.s32.totalorder %s12, 1
      %s109 = scalar_select %p108, %s12, 1
      %s110 = smul.addr %s109, 8
      %s111 = scalar_lea.vmem %s1, %s110
      %v112 = vld [vmem:[%s107] sm:$0xff]
      %113 = vst [vmem:[%s111] sm:$0xff] %v112
      %p114 = scmp.lt.s32.totalorder %s12, 1
      %s115 = scalar_select %p114, %s12, 1
      %s116 = smul.addr %s115, 8
      %s117 = scalar_lea.vmem %s1, %s116
      // Predicated region
      $region25: #{_view_impl.1} parent=23 // pred_check
        %p118 = pneg %p56
      $region26: #{_view_impl.1} parent=23 // pred_check_branch
        %120 = sbr.rel (%p118) target = $region28
      $region27: #{_view_impl.1} parent=23 // pred_region
        _
      $region28: #{_view_impl.1} parent=23 // pred_fallthru
        _
    $region24: #{_view_impl.1} parent=5 // pred_fallthru
      _
    %p121 = scmp.le.s32.totalorder 2, %s7
    // Predicated region
    $region29: #{_view_impl.1} parent=5 // pred_check
      %p122 = pneg %p121
    $region30: #{_view_impl.1} parent=5 // pred_check_branch
      %124 = sbr.rel (%p122) target = $region32
    $region31: #{_view_impl.1} parent=5 // pred_region
      %s125 = ssub.s32 %s7, 2
      // Predicated region
      $region33: #{_view_impl.1} parent=31 // pred_check
        %p126 = pneg %p62
      $region34: #{_view_impl.1} parent=31 // pred_check_branch
        %128 = sbr.rel (%p126) target = $region36
      $region35: #{_view_impl.1} parent=31 // pred_region
        %p129 = scmp.lt.s32.totalorder %s13, 1
        %s130 = scalar_select %p129, %s13, 1
        %s131 = smul.addr %s130, 8
        %s132 = scalar_lea.vmem %s1, %s131
      $region36: #{_view_impl.1} parent=31 // pred_fallthru
        _
    $region32: #{_view_impl.1} parent=5 // pred_fallthru
      _
  $region6: #{_view_impl.1} parent=0 // loop_footer
    %s11 = sadd.s32 1, %s7
  $region7: #{_view_impl.1} parent=0 // loop_footer_branch
    %6 = sbr.rel target = $region3
  $region8: #{_view_impl.1} parent=0 // loop_exit
    _

</llo_original>
